<compile_context>
chip_gen: v7x
topology: tpu7x:2x2x1
jax: 0.10.0
libtpu: 0.0.40
codegen_flags: <defaults>
</compile_context>

<pallas_src>
import functools

import jax
import jax.numpy as jnp
from jax import lax
from jax.experimental import pallas as pl
from jax.experimental.pallas import tpu as pltpu


def _round_up(x, m):
    return ((x + m - 1) // m) * m


def _cdiv(a, b):
    return (a + b - 1) // b


def _physical_vmem_bytes():
    try:
        return int(pltpu.get_tpu_info().vmem_capacity_bytes)
    except Exception:
        return 64 << 20  # conservative fallback (v7x per-TensorCore VMEM)


def _vmem_budget(tb, dp, tm, cp, kt, wbytes):
    """Rough VMEM footprint for the chosen tiling (buffers + intermediates)."""
    x_blk = tb * dp * wbytes * 2                        # double-buffered features
    w_buf = 1 if kt == 1 else 2                         # kt==1 -> Buffered(1)
    wr_blk = dp * tm * wbytes * w_buf
    wnt_blk = tm * cp * wbytes * w_buf
    out_blk = tb * cp * 4 * 2
    scratch = tb * cp * 4 + tb * 128 * 4                # acc + ||h||^2
    interm = 3 * tb * tm * 4                            # h (f32) + temps
    return x_blk + wr_blk + wnt_blk + out_blk + scratch + interm


def ranpac_kernel(x_ref, wr_ref, wnt_ref, out_ref, acc_ref, hsq_ref):
    # x_ref  : (TB, Dp)  bf16 feature tile (constant across the M axis)
    # wr_ref : (Dp, TM)  bf16 random-projection weight tile
    # wnt_ref: (TM, Cp)  bf16 pre-normalized, sigma-scaled classifier weight^T tile
    # out_ref: (TB, Cp)  f32 logits tile
    # acc_ref: (TB, Cp)  f32 partial (un-normalized) logits
    # hsq_ref: (TB, 1)   f32 partial ||h||^2 per row
    k = pl.program_id(1)

    @pl.when(k == 0)
    def _():
        acc_ref[...] = jnp.zeros_like(acc_ref)
        hsq_ref[...] = jnp.zeros_like(hsq_ref)

    # Random projection + ReLU for this M tile (MXU, f32 accumulation).
    h = jnp.dot(x_ref[...], wr_ref[...], preferred_element_type=jnp.float32)
    h = jnp.maximum(h, 0.0)

    # Accumulate squared row norm and un-normalized cosine logits.
    hsq_ref[...] += jnp.sum(h * h, axis=1, keepdims=True)
    acc_ref[...] += jnp.dot(h.astype(wnt_ref.dtype), wnt_ref[...],
                            preferred_element_type=jnp.float32)

    @pl.when(k == pl.num_programs(1) - 1)
    def _():
        # F.normalize eps semantics: 1/max(||h||,1e-12) == rsqrt(max(||h||^2,1e-24)).
        inv_norm = lax.rsqrt(jnp.maximum(hsq_ref[...], 1e-24))
        out_ref[...] = (acc_ref[...] * inv_norm).astype(out_ref.dtype)


def _prepare_weights(w_rand, fc_weight, sigma, *, block_b, matmul_dtype):
    """Batch-invariant weight prep: normalize, fold sigma, transpose, pad, cast."""
    D, M = w_rand.shape
    C, M2 = fc_weight.shape
    assert M == M2, "fc weight in_features must equal M"

    Dp = _round_up(D, 128)
    Cp = _round_up(C, 128)
    wbytes = jnp.dtype(matmul_dtype).itemsize
    tb_max = _round_up(max(block_b, 16), 16)
    target = _physical_vmem_bytes() * 4 // 5

    # Pick the M tile: largest (fewest k steps) that fits the VMEM budget.
    kt, Mp, TM = 1, _round_up(M, 128), _round_up(M, 128)
    for cand in (1, 2, 4, 8, 16, 32, 64):
        mp = _round_up(M, cand * 128)
        tm = mp // cand
        kt, Mp, TM = cand, mp, tm
        if _vmem_budget(tb_max, Dp, tm, Cp, cand, wbytes) <= target:
            break

    # Hoisted classifier normalization with sigma folded in, transposed to (M, C):
    # (h_n @ w_n.T) * sigma == h_n @ (sigma * w_n).T
    sigma_f = jnp.asarray(sigma, jnp.float32)
    fcw = fc_weight.astype(jnp.float32)
    w_norm = jnp.sqrt(jnp.sum(fcw * fcw, axis=1, keepdims=True))
    wnt = (fcw * (sigma_f / jnp.maximum(w_norm, 1e-12))).T          # (M, C)

    # Zero padding is exact for every dim here.
    wr_p = jnp.pad(w_rand.astype(jnp.float32),
                   ((0, Dp - D), (0, Mp - M))).astype(matmul_dtype)
    wnt_p = jnp.pad(wnt, ((0, Mp - M), (0, Cp - C))).astype(matmul_dtype)

    meta = dict(num_classes=C, feat_dim=D, m_tile=TM)
    return wr_p, wnt_p, meta


def _ranpac_apply(features, wr_p, wnt_p, *, num_classes, feat_dim, m_tile,
                  block_b, matmul_dtype):
    B, D = features.shape
    assert D == feat_dim, "feature dim does not match prepared weights"
    Dp, Mp = wr_p.shape
    Mp2, Cp = wnt_p.shape
    assert Mp == Mp2 and Mp % m_tile == 0
    kt = Mp // m_tile

    # Batch tiling: balanced tiles; if only one tile and batch is large enough,
    # split into 2 so both v7x TensorCores get "parallel" grid work.
    nb_t = max(1, _cdiv(B, block_b))
    if nb_t == 1 and B > 16:
        nb_t = 2
    TB = _round_up(_cdiv(B, nb_t), 16)      # multiple of 16 (bf16 sublane pack)
    Bp = _round_up(B, TB)
    nb = Bp // TB

    # bf16 feature DMA (cast folded into the pad; no in-kernel cast).
    x_p = jnp.pad(features.astype(matmul_dtype), ((0, Bp - B), (0, Dp - D)))

    wbytes = jnp.dtype(matmul_dtype).itemsize
    budget = _vmem_budget(TB, Dp, m_tile, Cp, kt, wbytes)
    vmem_limit = int(min(_physical_vmem_bytes(),
                         max(budget * 3 // 2 + (4 << 20), 32 << 20)))

    if kt == 1:
        # Resident weight blocks: single-buffer (constant index map, no need
        # for the implicit double buffer -> big VMEM savings on v7x).
        wr_spec = pl.BlockSpec((Dp, m_tile), lambda i, k: (0, k),
                               pipeline_mode=pl.Buffered(1))
        wnt_spec = pl.BlockSpec((m_tile, Cp), lambda i, k: (k, 0),
                                pipeline_mode=pl.Buffered(1))
    else:
        # Tiled over M: keep default double buffering for DMA/compute overlap.
        wr_spec = pl.BlockSpec((Dp, m_tile), lambda i, k: (0, k))
        wnt_spec = pl.BlockSpec((m_tile, Cp), lambda i, k: (k, 0))

    out_p = pl.pallas_call(
        ranpac_kernel,
        out_shape=jax.ShapeDtypeStruct((Bp, Cp), jnp.float32),
        grid=(nb, kt),
        in_specs=[
            pl.BlockSpec((TB, Dp), lambda i, k: (i, 0)),   # features: tiled over B
            wr_spec,                                       # W_rand: (Dp, TM) tiles
            wnt_spec,                                      # (sigma*w_n).T: (TM, Cp)
        ],
        out_specs=pl.BlockSpec((TB, Cp), lambda i, k: (i, 0)),
        scratch_shapes=[pltpu.VMEM((TB, Cp), jnp.float32),   # logits accumulator
                        pltpu.VMEM((TB, 1), jnp.float32)],   # ||h||^2 accumulator
        compiler_params=pltpu.CompilerParams(
            dimension_semantics=("parallel", "arbitrary"),
            vmem_limit_bytes=vmem_limit),
    )(x_p, wr_p, wnt_p)

    return out_p[:B, :num_classes]


class RanPACPallas:
    """Inference-time RanPAC: weights prepared once, fused Pallas forward per call."""

    def __init__(self, w_rand, fc_weight, sigma, *, block_b=256,
                 matmul_dtype=jnp.bfloat16):
        wr_p, wnt_p, meta = _prepare_weights(
            w_rand, fc_weight, sigma, block_b=block_b, matmul_dtype=matmul_dtype)
        self.wr_p = wr_p
        self.wnt_p = wnt_p
        self._apply = jax.jit(functools.partial(
            _ranpac_apply, block_b=block_b, matmul_dtype=matmul_dtype, **meta))

    def __call__(self, features):
        return self._apply(features, self.wr_p, self.wnt_p)


def ranpac_reference(features, w_rand, fc_weight, sigma):
    h = jnp.maximum(features @ w_rand, 0.0)
    h_n = h / jnp.maximum(jnp.linalg.norm(h, axis=1, keepdims=True), 1e-12)
    w_n = fc_weight / jnp.maximum(
        jnp.linalg.norm(fc_weight, axis=1, keepdims=True), 1e-12)
    return (h_n @ w_n.T) * sigma


if __name__ == "__main__":
    # Small, forward-consistent shapes: batch=8, feature dim=32, M=64, classes=16.
    B, D, M, C = 8, 32, 64, 16

    key = jax.random.PRNGKey(0)
    k_feat, k_wrand, k_fcw = jax.random.split(key, 3)

    # Input features (backbone output), (B, D).
    features = jax.random.normal(k_feat, (B, D), dtype=jnp.float32)

    # RanPAC.__init__: W_rand = torch.randn(dim, M)
    w_rand = jax.random.normal(k_wrand, (D, M), dtype=jnp.float32)

    # CosineLinear.reset_parameters: weight ~ U(-1/sqrt(M), 1/sqrt(M)), sigma = 1.0
    std = 1.0 / (M ** 0.5)
    fc_weight = jax.random.uniform(
        k_fcw, (C, M), dtype=jnp.float32, minval=-std, maxval=std)
    sigma = 1.0

    model = RanPACPallas(w_rand, fc_weight, sigma)
    out = jax.block_until_ready(model(features))

    ref = ranpac_reference(features, w_rand, fc_weight, sigma)
    assert out.shape == (B, C)
    # bf16 MXU operands (f32 accumulation) -> relaxed tolerance vs the f32 ref.
    assert jnp.allclose(out, ref, atol=2e-2, rtol=2e-2), \
        float(jnp.max(jnp.abs(out - ref)))

    print("KERNEL_OK")
</pallas_src>

<mosaic_0001>
module attributes {stable_mosaic.version = 11 : i64} {
  func.func @ranpac_kernel(%arg0: i32, %arg1: i32, %arg2: memref<16x128xbf16, #tpu.memory_space<vmem>>, %arg3: memref<128x128xbf16, #tpu.memory_space<vmem>>, %arg4: memref<128x128xbf16, #tpu.memory_space<vmem>>, %arg5: memref<16x128xf32, #tpu.memory_space<vmem>>, %arg6: memref<16x128xf32, #tpu.memory_space<vmem>>, %arg7: memref<16x1xf32, #tpu.memory_space<vmem>>) attributes {dimension_semantics = [#tpu.dimension_semantics<parallel>, #tpu.dimension_semantics<arbitrary>], iteration_bounds = array<i64: 1, 1>, scalar_prefetch = 0 : i64, scratch_operands = 2 : i64, tpu.core_type = #tpu.core_type<tc>, window_params = [{transform_indices = @transform_0, window_bounds = array<i64: 16, 128>}, {pipeline_mode = #tpu.pipeline_mode<synchronous>, transform_indices = @transform_1, window_bounds = array<i64: 128, 128>}, {pipeline_mode = #tpu.pipeline_mode<synchronous>, transform_indices = @transform_2, window_bounds = array<i64: 128, 128>}, {transform_indices = @transform_3, window_bounds = array<i64: 16, 128>}]} {
    %c0_i32 = arith.constant 0 : i32
    %0 = arith.cmpi eq, %arg1, %c0_i32 : i32
    %1 = arith.extui %0 : i1 to i32
    %c0_i32_0 = arith.constant 0 : i32
    %2 = arith.cmpi ne, %1, %c0_i32_0 : i32
    scf.if %2 {
      %cst_19 = arith.constant 0.000000e+00 : f32
      %23 = vector.broadcast %cst_19 : f32 to vector<16x128xf32>
      %c0_20 = arith.constant 0 : index
      %c0_21 = arith.constant 0 : index
      %24 = vector.load %arg6[%c0_20, %c0_21] : memref<16x128xf32, #tpu.memory_space<vmem>>, vector<16x128xf32>
      tpu.vector_store %arg6[%c0_20, %c0_21], %23 {strides = array<i32>} : memref<16x128xf32, #tpu.memory_space<vmem>>, vector<16x128xf32>,
      %cst_22 = arith.constant 0.000000e+00 : f32
      %25 = vector.broadcast %cst_22 : f32 to vector<16x1xf32>
      %c0_23 = arith.constant 0 : index
      %c0_24 = arith.constant 0 : index
      %26 = vector.load %arg7[%c0_23, %c0_24] : memref<16x1xf32, #tpu.memory_space<vmem>>, vector<16x1xf32>
      tpu.vector_store %arg7[%c0_23, %c0_24], %25 {strides = array<i32>} : memref<16x1xf32, #tpu.memory_space<vmem>>, vector<16x1xf32>,
    } else {
    }
    %c0 = arith.constant 0 : index
    %c0_1 = arith.constant 0 : index
    %3 = vector.load %arg2[%c0, %c0_1] : memref<16x128xbf16, #tpu.memory_space<vmem>>, vector<16x128xbf16>
    %c0_2 = arith.constant 0 : index
    %c0_3 = arith.constant 0 : index
    %4 = vector.load %arg3[%c0_2, %c0_3] : memref<128x128xbf16, #tpu.memory_space<vmem>>, vector<128x128xbf16>
    %cst = arith.constant dense<0.000000e+00> : vector<16x128xf32>
    %5 = tpu.matmul %3, %4, %cst {dimension_numbers = #tpu.dot_dimension_numbers<[1], [0], [0], [1], [0, 0, 1, 1], [], []>} : vector<16x128xbf16>, vector<128x128xbf16>, vector<16x128xf32> -> vector<16x128xf32>
    %cst_4 = arith.constant 0.000000e+00 : f32
    %6 = vector.broadcast %cst_4 : f32 to vector<16x128xf32>
    %7 = arith.maximumf %5, %6 : vector<16x128xf32>
    %c0_5 = arith.constant 0 : index
    %c0_6 = arith.constant 0 : index
    %8 = vector.load %arg7[%c0_5, %c0_6] : memref<16x1xf32, #tpu.memory_space<vmem>>, vector<16x1xf32>
    %9 = arith.mulf %7, %7 : vector<16x128xf32>
    %cst_7 = arith.constant dense<0.000000e+00> : vector<16xf32>
    %10 = vector.multi_reduction <add>, %9, %cst_7 [1] : vector<16x128xf32> to vector<16xf32>
    %11 = vector.shape_cast %10 : vector<16xf32> to vector<16x1xf32>
    %12 = arith.addf %8, %11 : vector<16x1xf32>
    %c0_8 = arith.constant 0 : index
    %c0_9 = arith.constant 0 : index
    %13 = vector.load %arg7[%c0_8, %c0_9] : memref<16x1xf32, #tpu.memory_space<vmem>>, vector<16x1xf32>
    tpu.vector_store %arg7[%c0_8, %c0_9], %12 {strides = array<i32>} : memref<16x1xf32, #tpu.memory_space<vmem>>, vector<16x1xf32>,
    %c0_10 = arith.constant 0 : index
    %c0_11 = arith.constant 0 : index
    %14 = vector.load %arg6[%c0_10, %c0_11] : memref<16x128xf32, #tpu.memory_space<vmem>>, vector<16x128xf32>
    %15 = arith.truncf %7 : vector<16x128xf32> to vector<16x128xbf16>
    %c0_12 = arith.constant 0 : index
    %c0_13 = arith.constant 0 : index
    %16 = vector.load %arg4[%c0_12, %c0_13] : memref<128x128xbf16, #tpu.memory_space<vmem>>, vector<128x128xbf16>
    %cst_14 = arith.constant dense<0.000000e+00> : vector<16x128xf32>
    %17 = tpu.matmul %15, %16, %cst_14 {dimension_numbers = #tpu.dot_dimension_numbers<[1], [0], [0], [1], [0, 0, 1, 1], [], []>} : vector<16x128xbf16>, vector<128x128xbf16>, vector<16x128xf32> -> vector<16x128xf32>
    %18 = arith.addf %14, %17 : vector<16x128xf32>
    %c0_15 = arith.constant 0 : index
    %c0_16 = arith.constant 0 : index
    %19 = vector.load %arg6[%c0_15, %c0_16] : memref<16x128xf32, #tpu.memory_space<vmem>>, vector<16x128xf32>
    tpu.vector_store %arg6[%c0_15, %c0_16], %18 {strides = array<i32>} : memref<16x128xf32, #tpu.memory_space<vmem>>, vector<16x128xf32>,
    %c0_i32_17 = arith.constant 0 : i32
    %20 = arith.cmpi eq, %arg1, %c0_i32_17 : i32
    %21 = arith.extui %20 : i1 to i32
    %c0_i32_18 = arith.constant 0 : i32
    %22 = arith.cmpi ne, %21, %c0_i32_18 : i32
    scf.if %22 {
      %c0_19 = arith.constant 0 : index
      %c0_20 = arith.constant 0 : index
      %23 = vector.load %arg7[%c0_19, %c0_20] : memref<16x1xf32, #tpu.memory_space<vmem>>, vector<16x1xf32>
      %cst_21 = arith.constant 1.000000e-24 : f32
      %24 = vector.broadcast %cst_21 : f32 to vector<16x1xf32>
      %25 = arith.maximumf %23, %24 : vector<16x1xf32>
      %26 = math.rsqrt %25 : vector<16x1xf32>
      %c0_22 = arith.constant 0 : index
      %c0_23 = arith.constant 0 : index
      %27 = vector.load %arg6[%c0_22, %c0_23] : memref<16x128xf32, #tpu.memory_space<vmem>>, vector<16x128xf32>
      %28 = vector.broadcast %26 : vector<16x1xf32> to vector<16x128xf32>
      %29 = arith.mulf %27, %28 : vector<16x128xf32>
      %c0_24 = arith.constant 0 : index
      %c0_25 = arith.constant 0 : index
      %30 = vector.load %arg5[%c0_24, %c0_25] : memref<16x128xf32, #tpu.memory_space<vmem>>, vector<16x128xf32>
      tpu.vector_store %arg5[%c0_24, %c0_25], %29 {strides = array<i32>} : memref<16x128xf32, #tpu.memory_space<vmem>>, vector<16x128xf32>,
    } else {
    }
    return
  }
  func.func @transform_0(%arg0: i32, %arg1: i32) -> (i32, i32) {
    %c0_i32 = arith.constant 0 : i32
    %c0_i32_0 = arith.constant 0 : i32
    return %arg0, %c0_i32 : i32, i32
  }
  func.func @transform_1(%arg0: i32, %arg1: i32) -> (i32, i32) {
    %c0_i32 = arith.constant 0 : i32
    %c0_i32_0 = arith.constant 0 : i32
    return %c0_i32, %arg1 : i32, i32
  }
  func.func @transform_2(%arg0: i32, %arg1: i32) -> (i32, i32) {
    %c0_i32 = arith.constant 0 : i32
    %c0_i32_0 = arith.constant 0 : i32
    return %arg1, %c0_i32 : i32, i32
  }
  func.func @transform_3(%arg0: i32, %arg1: i32) -> (i32, i32) {
    %c0_i32 = arith.constant 0 : i32
    %c0_i32_0 = arith.constant 0 : i32
    return %arg0, %c0_i32 : i32, i32
  }
}

</mosaic_0001>

<llo_original>
// kernel: _ranpac_apply.1
$region0: #{_ranpac_apply.1}
  #allocation0 [shape = 'u32[]', space=smem, size = 0x4, offset = 0x4, fixed_abs, tag = 'smem constant byte address 0x4 - core index']
  #allocation1 [shape = 'u32[144,128]{1,0:T(1,128)}', space=vmem, size = 0x12000, scoped, tag = 'internal scratch']
  #allocation2 [shape = 'f32[16,128]{1,0:T(8,128)}', space=vmem, size = 0x2000, scoped, tag = 'scratch operand']
  #allocation3 [shape = 'f32[16,1]{1,0:T(8,128)}', space=vmem, size = 0x2000, scoped, tag = 'scratch operand']
  %s0 = inlined_call_operand.vmem [shape: bf16[16,128], index: 0, kind: input, shape index: {}]
  %s1 = inlined_call_operand.hbm [shape: bf16[128,128], index: 1, kind: input, shape index: {}]
  %s2 = inlined_call_operand.hbm [shape: bf16[128,128], index: 2, kind: input, shape index: {}]
  %s3 = inlined_call_operand.vmem [shape: f32[16,128], index: 3, kind: output, shape index: {}]
  %s4 = sld [smem:[#allocation0]]
  $region38: #{_ranpac_apply.1} parent=0
    _
  %s6 = ssub.s32 1, %s4
  %s7 = scalar_select 0, %s6, %s4
  $region1: #{_ranpac_apply.1} parent=0
    #allocation4 [shape = 'u8[32768]{0}', space=vmem, size = 0x8000, scoped, tag = 'input window, operand 1, single buffered']
    #allocation5 [shape = 's32[1]{0}', space=sflag, size = 0x4, scoped, tag = 'scoped memory for _ranpac_apply.1']
    #allocation6 [shape = 'u8[32768]{0}', space=vmem, size = 0x8000, scoped, tag = 'input window, operand 2, single buffered']
    #allocation7 [shape = 's32[1]{0}', space=sflag, size = 0x4, scoped, tag = 'scoped memory for _ranpac_apply.1']
    %8 = vsyncpa [#allocation5], 0
    %9 = vsyncpa [#allocation7], 0
    // Predicated region
    $region2: #{_ranpac_apply.1} parent=1 // pred_check
      _
    $region3: #{_ranpac_apply.1} parent=1 // pred_check_branch
      %11 = sbr.rel (0) target = $region5
    $region4: #{_ranpac_apply.1} parent=1 // pred_region
      _
    $region5: #{_ranpac_apply.1} parent=1 // pred_fallthru
      _
    // Predicated region
    $region6: #{_ranpac_apply.1} parent=1 // pred_check
      _
    $region7: #{_ranpac_apply.1} parent=1 // pred_check_branch
      %13 = sbr.rel (0) target = $region9
    $region8: #{_ranpac_apply.1} parent=1 // pred_region
      %s15 = ssub.s32 1024, 1024
      %16 = vsyncadd [#allocation5], %s15
      %s17 = sshll.u32 [#allocation4], 4
      %s18 = int_to_ptr.vmem [resolvable:$true] %s17
      %23 = dma.hbm_to_vmem [thread:$0]  %s1, 1024, %s18, [#allocation5], 64, 64, 4
    $region9: #{_ranpac_apply.1} parent=1 // pred_fallthru
      _
    // Predicated region
    $region10: #{_ranpac_apply.1} parent=1 // pred_check
      _
    $region11: #{_ranpac_apply.1} parent=1 // pred_check_branch
      %25 = sbr.rel (0) target = $region13
    $region12: #{_ranpac_apply.1} parent=1 // pred_region
      %s27 = ssub.s32 1024, 1024
      %28 = vsyncadd [#allocation7], %s27
      %s29 = sshll.u32 [#allocation6], 4
      %s30 = int_to_ptr.vmem [resolvable:$true] %s29
      %35 = dma.hbm_to_vmem [thread:$0]  %s2, 1024, %s30, [#allocation7], 64, 64, 4
    $region13: #{_ranpac_apply.1} parent=1 // pred_fallthru
      _
    // Predicated region
    $region14: #{_ranpac_apply.1} parent=1 // pred_check
      _
    $region15: #{_ranpac_apply.1} parent=1 // pred_check_branch
      %37 = sbr.rel (0) target = $region17
    $region16: #{_ranpac_apply.1} parent=1 // pred_region
      %38 = dma.done [#allocation5], 1024
    $region17: #{_ranpac_apply.1} parent=1 // pred_fallthru
      _
    // Predicated region
    $region18: #{_ranpac_apply.1} parent=1 // pred_check
      _
    $region19: #{_ranpac_apply.1} parent=1 // pred_check_branch
      %40 = sbr.rel (0) target = $region21
    $region20: #{_ranpac_apply.1} parent=1 // pred_region
      %41 = dma.done [#allocation7], 1024
    $region21: #{_ranpac_apply.1} parent=1 // pred_fallthru
      _
    %p43 = scmp.eq.s32.totalorder 0, 0
    // Predicated region
    $region22: #{_ranpac_apply.1} parent=1 // pred_check
      %p44 = pneg %p43
    $region23: #{_ranpac_apply.1} parent=1 // pred_check_branch
      %46 = sbr.rel (%p44) target = $region25
    $region24: #{_ranpac_apply.1} parent=1 // pred_region
      %47 = vst [vmem:[#allocation2] sm:$0xff] 0.0
      %48 = vst [vmem:[#allocation2 + $0x8] sm:$0xff] 0.0
      %vm49 = vcmask 7168
      %50 = vst.msk [vmem:[#allocation3] sm:$0xff] %vm49, 0.0
      %51 = vst.msk [vmem:[#allocation3 + $0x8] sm:$0xff] %vm49, 0.0
    $region25: #{_ranpac_apply.1} parent=1 // pred_fallthru
      _
    %v52 = vld [vmem:[%s0] sm:$0xf]
    %v53 = vld [vmem:[%s0 + $0x4] sm:$0xf]
    %v54 = vld [vmem:[#allocation4] sm:$0xf]
    %v55 = vld [vmem:[#allocation4 + $0x4] sm:$0xf]
    %v56 = vld [vmem:[#allocation4 + $0x8] sm:$0xf]
    %v57 = vld [vmem:[#allocation4 + $0xc] sm:$0xf]
    %v58 = vld [vmem:[#allocation4 + $0x10] sm:$0xf]
    %v59 = vld [vmem:[#allocation4 + $0x14] sm:$0xf]
    %v60 = vld [vmem:[#allocation4 + $0x18] sm:$0xf]
    %v61 = vld [vmem:[#allocation4 + $0x1c] sm:$0xf]
    %v62 = vld [vmem:[#allocation4 + $0x20] sm:$0xf]
    %v63 = vld [vmem:[#allocation4 + $0x24] sm:$0xf]
    %v64 = vld [vmem:[#allocation4 + $0x28] sm:$0xf]
    %v65 = vld [vmem:[#allocation4 + $0x2c] sm:$0xf]
    %v66 = vld [vmem:[#allocation4 + $0x30] sm:$0xf]
    %v67 = vld [vmem:[#allocation4 + $0x34] sm:$0xf]
    %v68 = vld [vmem:[#allocation4 + $0x38] sm:$0xf]
    %v69 = vld [vmem:[#allocation4 + $0x3c] sm:$0xf]
    %v72 = vunpack.c.l.b16 %v52
    %v73 = vunpack.c.l.b16 %v53
    %v74 = vpack.c.b16 %v73, %v72
    %v92 = vunpack.c.l.b16 %v54
    %v93 = vunpack.c.l.b16 %v55
    %v94 = vunpack.c.l.b16 %v56
    %v95 = vunpack.c.l.b16 %v57
    %v96 = vunpack.c.l.b16 %v58
    %v97 = vunpack.c.l.b16 %v59
    %v98 = vunpack.c.l.b16 %v60
    %v99 = vunpack.c.l.b16 %v61
    %v100 = vunpack.c.l.b16 %v62
    %v101 = vunpack.c.l.b16 %v63
    %v102 = vunpack.c.l.b16 %v64
    %v103 = vunpack.c.l.b16 %v65
    %v104 = vunpack.c.l.b16 %v66
    %v105 = vunpack.c.l.b16 %v67
    %v106 = vunpack.c.l.b16 %v68
    %v107 = vunpack.c.l.b16 %v69
    %v108 = vpack.c.b16 %v93, %v92
    %v109 = vpack.c.b16 %v95, %v94
    %v110 = vpack.c.b16 %v97, %v96
    %v111 = vpack.c.b16 %v99, %v98
    %v112 = vpack.c.b16 %v101, %v100
    %v113 = vpack.c.b16 %v103, %v102
    %v114 = vpack.c.b16 %v105, %v104
    %v115 = vpack.c.b16 %v107, %v106
    %124 = vmatprep.subr.bf16.mxu0 0
    %125 = vmatpush1.bf16.msra.mxu0 %v108
    %126 = vmatprep.subr.bf16.mxu0 0
    %127 = vmatpush1.bf16.msra.mxu0 %v109
    %128 = vmatprep.subr.bf16.mxu0 0
    %129 = vmatpush1.bf16.msra.mxu0 %v110
    %130 = vmatprep.subr.bf16.mxu0 0
    %131 = vmatpush1.bf16.msra.mxu0 %v111
    %132 = vmatprep.subr.bf16.mxu0 0
    %133 = vmatpush1.bf16.msra.mxu0 %v112
    %134 = vmatprep.subr.bf16.mxu0 0
    %135 = vmatpush1.bf16.msra.mxu0 %v113
    %136 = vmatprep.subr.bf16.mxu0 0
    %137 = vmatpush1.bf16.msra.mxu0 %v114
    %138 = vmatprep.subr.bf16.mxu0 0
    %139 = vmatpush1.bf16.msra.mxu0 %v115
    %140 = vmatprep.subr.bf16.mxu0 0
    %141 = vmatpush1.bf16.msra.mxu0 0
    %142 = vmatprep.subr.bf16.mxu0 0
    %143 = vmatpush1.bf16.msra.mxu0 0
    %144 = vmatprep.subr.bf16.mxu0 0
    %145 = vmatpush1.bf16.msra.mxu0 0
    %146 = vmatprep.subr.bf16.mxu0 0
    %147 = vmatpush1.bf16.msra.mxu0 0
    %148 = vmatprep.subr.bf16.mxu0 0
    %149 = vmatpush1.bf16.msra.mxu0 0
    %150 = vmatprep.subr.bf16.mxu0 0
    %151 = vmatpush1.bf16.msra.mxu0 0
    %152 = vmatprep.subr.bf16.mxu0 0
    %153 = vmatpush1.bf16.msra.mxu0 0
    %154 = vmatprep.subr.bf16.mxu0 0
    %155 = vmatpush1.bf16.msra.mxu0 0
    %156 = vmatprep.mubr.bf16.mxu0 0
    %157 = vmatmul.mubr.bf16.gmra.mrb[0].mxu0 %v74
    %v158 = vpop.f32.mrb[0].mxu0
    %v159 = vadd.f32 0.0, %v158
    %v160 = vpop.f32.mrb[0].mxu0
    %v161 = vpop.f32.mrb[0].mxu0
    %v162 = vadd.f32 0.0, %v161
    %v163 = vpop.f32.mrb[0].mxu0
    %164 = vdwg.mxu0
    %v165 = vmax.f32 %v159, 0.0
    %v166 = vmax.f32 %v162, 0.0
    %v167 = vld [vmem:[#allocation3] sm:$0xff]
    %v168 = vld [vmem:[#allocation3 + $0x8] sm:$0xff]
    %v169 = vmul.f32 %v165, %v165
    %v170 = vmul.f32 %v166, %v166
    %171 = vadd.xlane.f32.xlu0 %v169
    %v172 = vpop.xlane.xlu0 %171
    %173 = vadd.xlane.f32.xlu0 %v170
    %v174 = vpop.xlane.xlu0 %173
    %v175 = vadd.f32 %v167, %v172
    %v176 = vadd.f32 %v168, %v174
    %vm177 = vcmask 7168
    %178 = vst.msk [vmem:[#allocation3] sm:$0xff] %vm177, %v175
    %179 = vst.msk [vmem:[#allocation3 + $0x8] sm:$0xff] %vm177, %v176
    %v180 = vld [vmem:[#allocation2] sm:$0xff]
    %v181 = vld [vmem:[#allocation2 + $0x8] sm:$0xff]
    %v182 = vpack.c.bf16 %v166, %v165
    %v183 = vld [vmem:[#allocation6] sm:$0xf]
    %v184 = vld [vmem:[#allocation6 + $0x4] sm:$0xf]
    %v185 = vld [vmem:[#allocation6 + $0x8] sm:$0xf]
    %v186 = vld [vmem:[#allocation6 + $0xc] sm:$0xf]
    %v187 = vld [vmem:[#allocation6 + $0x10] sm:$0xf]
    %v188 = vld [vmem:[#allocation6 + $0x14] sm:$0xf]
    %v189 = vld [vmem:[#allocation6 + $0x18] sm:$0xf]
    %v190 = vld [vmem:[#allocation6 + $0x1c] sm:$0xf]
    %v191 = vld [vmem:[#allocation6 + $0x20] sm:$0xf]
    %v192 = vld [vmem:[#allocation6 + $0x24] sm:$0xf]
    %v193 = vld [vmem:[#allocation6 + $0x28] sm:$0xf]
    %v194 = vld [vmem:[#allocation6 + $0x2c] sm:$0xf]
    %v195 = vld [vmem:[#allocation6 + $0x30] sm:$0xf]
    %v196 = vld [vmem:[#allocation6 + $0x34] sm:$0xf]
    %v197 = vld [vmem:[#allocation6 + $0x38] sm:$0xf]
    %v198 = vld [vmem:[#allocation6 + $0x3c] sm:$0xf]
    %v215 = vunpack.c.l.b16 %v183
    %v216 = vunpack.c.l.b16 %v184
    %v217 = vunpack.c.l.b16 %v185
    %v218 = vunpack.c.l.b16 %v186
    %v219 = vunpack.c.l.b16 %v187
    %v220 = vunpack.c.l.b16 %v188
    %v221 = vunpack.c.l.b16 %v189
    %v222 = vunpack.c.l.b16 %v190
    %v223 = vunpack.c.l.b16 %v191
    %v224 = vunpack.c.l.b16 %v192
    %v225 = vunpack.c.l.b16 %v193
    %v226 = vunpack.c.l.b16 %v194
    %v227 = vunpack.c.l.b16 %v195
    %v228 = vunpack.c.l.b16 %v196
    %v229 = vunpack.c.l.b16 %v197
    %v230 = vunpack.c.l.b16 %v198
    %v231 = vpack.c.b16 %v216, %v215
    %v232 = vpack.c.b16 %v218, %v217
    %v233 = vpack.c.b16 %v220, %v219
    %v234 = vpack.c.b16 %v222, %v221
    %v235 = vpack.c.b16 %v224, %v223
    %v236 = vpack.c.b16 %v226, %v225
    %v237 = vpack.c.b16 %v228, %v227
    %v238 = vpack.c.b16 %v230, %v229
    %247 = vmatprep.subr.bf16.mxu0 0
    %248 = vmatpush1.bf16.msra.mxu0 %v231
    %249 = vmatprep.subr.bf16.mxu0 0
    %250 = vmatpush1.bf16.msra.mxu0 %v232
    %251 = vmatprep.subr.bf16.mxu0 0
    %252 = vmatpush1.bf16.msra.mxu0 %v233
    %253 = vmatprep.subr.bf16.mxu0 0
    %254 = vmatpush1.bf16.msra.mxu0 %v234
    %255 = vmatprep.subr.bf16.mxu0 0
    %256 = vmatpush1.bf16.msra.mxu0 %v235
    %257 = vmatprep.subr.bf16.mxu0 0
    %258 = vmatpush1.bf16.msra.mxu0 %v236
    %259 = vmatprep.subr.bf16.mxu0 0
    %260 = vmatpush1.bf16.msra.mxu0 %v237
    %261 = vmatprep.subr.bf16.mxu0 0
    %262 = vmatpush1.bf16.msra.mxu0 %v238
    %263 = vmatprep.subr.bf16.mxu0 0
    %264 = vmatpush1.bf16.msra.mxu0 0
    %265 = vmatprep.subr.bf16.mxu0 0
    %266 = vmatpush1.bf16.msra.mxu0 0
    %267 = vmatprep.subr.bf16.mxu0 0
    %268 = vmatpush1.bf16.msra.mxu0 0
    %269 = vmatprep.subr.bf16.mxu0 0
    %270 = vmatpush1.bf16.msra.mxu0 0
    %271 = vmatprep.subr.bf16.mxu0 0
    %272 = vmatpush1.bf16.msra.mxu0 0
    %273 = vmatprep.subr.bf16.mxu0 0
    %274 = vmatpush1.bf16.msra.mxu0 0
    %275 = vmatprep.subr.bf16.mxu0 0
    %276 = vmatpush1.bf16.msra.mxu0 0
    %277 = vmatprep.subr.bf16.mxu0 0
    %278 = vmatpush1.bf16.msra.mxu0 0
    %279 = vmatprep.mubr.bf16.mxu0 0
    %280 = vmatmul.mubr.bf16.gmra.mrb[0].mxu0 %v182
    %v281 = vpop.f32.mrb[0].mxu0
    %v282 = vadd.f32 0.0, %v281
    %v283 = vpop.f32.mrb[0].mxu0
    %v284 = vpop.f32.mrb[0].mxu0
    %v285 = vadd.f32 0.0, %v284
    %v286 = vpop.f32.mrb[0].mxu0
    %287 = vdwg.mxu0
    %v288 = vadd.f32 %v180, %v282
    %v289 = vadd.f32 %v181, %v285
    %290 = vst [vmem:[#allocation2] sm:$0xff] %v288
    %291 = vst [vmem:[#allocation2 + $0x8] sm:$0xff] %v289
    // Predicated region
    $region26: #{_ranpac_apply.1} parent=1 // pred_check
      %p292 = pneg %p43
    $region27: #{_ranpac_apply.1} parent=1 // pred_check_branch
      %294 = sbr.rel (%p292) target = $region29
    $region28: #{_ranpac_apply.1} parent=1 // pred_region
      %v295 = vld [vmem:[#allocation3] sm:$0xff]
      %v296 = vld [vmem:[#allocation3 + $0x8] sm:$0xff]
      %v297 = vmax.f32 %v295, 1e-24
      %v298 = vmax.f32 %v296, 1e-24
      %v299 = vrsqrt.pop %v297
      %v300 = vrsqrt.pop %v298
      %v301 = vld [vmem:[#allocation2] sm:$0xff]
      %v302 = vld [vmem:[#allocation2 + $0x8] sm:$0xff]
      %304 = vset.pattern.permute.xlu0 0
      %305 = vperm.xlu0 %304, %v299
      %v306 = vpop.permute.xlu0 %305
      %309 = vset.pattern.permute.xlu0 0
      %310 = vperm.xlu0 %309, %v300
      %v311 = vpop.permute.xlu0 %310
      %v313 = vmul.f32 %v301, %v306
      %v314 = vmul.f32 %v302, %v311
      %315 = vst [vmem:[%s3] sm:$0xff] %v313
      %316 = vst [vmem:[%s3 + $0x8] sm:$0xff] %v314
    $region29: #{_ranpac_apply.1} parent=1 // pred_fallthru
      _
    // Predicated region
    $region30: #{_ranpac_apply.1} parent=1 // pred_check
      _
    $region31: #{_ranpac_apply.1} parent=1 // pred_check_branch
      %318 = sbr.rel (0) target = $region33
    $region32: #{_ranpac_apply.1} parent=1 // pred_region
      _
    $region33: #{_ranpac_apply.1} parent=1 // pred_fallthru
      _
    // Predicated region
    $region34: #{_ranpac_apply.1} parent=1 // pred_check
      _
    $region35: #{_ranpac_apply.1} parent=1 // pred_check_branch
      %320 = sbr.rel (0) target = $region37
    $region36: #{_ranpac_apply.1} parent=1 // pred_region
      _
    $region37: #{_ranpac_apply.1} parent=1 // pred_fallthru
      _
    %321 = vsyncpa [#allocation5], 1
    %322 = vsyncpa [#allocation7], 1

</llo_original>
